<compile_context>
chip_gen: v6e
topology: v6e:2x2x1
jax: 0.10.0
libtpu: 0.0.40
codegen_flags: <defaults>
</compile_context>

<pallas_src>
import jax
import jax.numpy as jnp
from jax.experimental import pallas as pl
from jax.experimental.pallas import tpu as pltpu


# ----------------------------------------------------------------------------
# Pallas kernel
# ----------------------------------------------------------------------------

def _dc_kernel(f_ref, k_ref, m_ref, o_ref):
    """k-space data consistency, elementwise on interleaved re/im f32 tiles.

        out = x_k + F(x) * (1 - mask)

    All refs are (tr, tn) lane-dense f32 blocks; the mask is pre-expanded to
    the same interleaved width, so real and imaginary components are updated
    in one fused pass.
    """
    o_ref[...] = k_ref[...] + f_ref[...] * (1.0 - m_ref[...])


# ----------------------------------------------------------------------------
# Tiling helpers
# ----------------------------------------------------------------------------

_MAX_BLOCK_ELEMS = 256 * 1024     # 1 MiB of f32 per operand block
_ROW_TILE_CAP = 256               # rows per block (multiple of 8)


def _round_up(x, m):
    return ((x + m - 1) // m) * m


def _largest_tile(total, unit, cap):
    """Largest t with t % unit == 0, total % t == 0 and t <= cap.

    Assumes total % unit == 0 and cap >= unit.
    """
    q = total // unit
    best = 1
    d = 1
    while d * d <= q:
        if q % d == 0:
            for c in (d, q // d):
                if c * unit <= cap and c > best:
                    best = c
        d += 1
    return best * unit


# ----------------------------------------------------------------------------
# Wrapper
# ----------------------------------------------------------------------------

def data_consistency(x, x_k, mask):
    """ifft2(x_k + fft2(x) * (1 - mask)); complex stored in the trailing dim.

    x, x_k : (B, C, H, W, 2) float32
    mask   : (B, C, H, W), (B, C, H, W, 1) or (B, C, H, W, 2) float32
    returns: (B, C, H, W, 2), dtype of x
    """
    # TODO(synk): fft_utils is an external module in the reference; assumed to
    # be plain unnormalized, unshifted (i)fft2 over the two spatial dims with
    # real/imag stacked in the trailing dim. The FFT itself stays in XLA.
    B, C, H, W, _ = x.shape
    N, HW = B * C, H * W
    Wp = 2 * HW                                   # interleaved re/im width

    # ---- FFT of the image (XLA) and interleaved-f32 views -------------------
    c = jax.lax.complex(x[..., 0].astype(jnp.float32),
                        x[..., 1].astype(jnp.float32)).reshape(N, H, W)
    f = jnp.fft.fft2(c, axes=(-2, -1)).reshape(N, HW)
    f_ri = jnp.stack([jnp.real(f), jnp.imag(f)], axis=-1)        # (N, HW, 2)

    k_ri = x_k.astype(jnp.float32).reshape(N, HW, 2)             # free reshape

    if mask.ndim == x.ndim:                       # (B,C,H,W,1) or (B,C,H,W,2)
        m_ri = mask.astype(jnp.float32).reshape(N, HW, mask.shape[-1])
    else:                                         # (B,C,H,W)
        m_ri = mask.astype(jnp.float32).reshape(N, HW, 1)
    m_ri = jnp.broadcast_to(m_ri, (N, HW, 2))     # same mask for re & im

    # ---- Pad to lane-dense, VMEM-bounded tiles ------------------------------
    Wcols = _round_up(Wp, 128)                    # lane axis multiple of 128
    if N % 8 == 0:
        Nrows, row_tiled = N, True
    elif N * 128 <= _MAX_BLOCK_ELEMS:
        Nrows, row_tiled = N, False               # small: full-extent rows
    else:
        Nrows, row_tiled = _round_up(N, 8), True  # large & unaligned: pad rows

    pad_rows = Nrows - N
    pad_hw = (Wcols - Wp) // 2                    # pad in (re,im) pairs

    def _to_grid(a_ri):                           # (N, HW, 2) -> (Nrows, Wcols)
        if pad_rows or pad_hw:
            a_ri = jnp.pad(a_ri, ((0, pad_rows), (0, pad_hw), (0, 0)))
        return a_ri.reshape(Nrows, Wcols)

    f_i = _to_grid(f_ri)
    k_i = _to_grid(k_ri)
    m_i = _to_grid(m_ri)

    # ---- Tile selection (joint ~1 MiB per-block budget) ---------------------
    if row_tiled:
        tr = _largest_tile(Nrows, 8, min(Nrows, _ROW_TILE_CAP))
    else:
        tr = Nrows
    col_cap = max(128, _MAX_BLOCK_ELEMS // tr)
    tn = _largest_tile(Wcols, 128, min(Wcols, col_cap))
    # Give the second TensorCore (v7x) something to do when the grid is (1,1).
    if Nrows // tr == 1 and Wcols // tn == 1 and Wcols % 256 == 0:
        tn = Wcols // 2
    grid = (Nrows // tr, Wcols // tn)

    spec = pl.BlockSpec((tr, tn), lambda i, j: (i, j))
    total = Nrows * Wcols

    out_i = pl.pallas_call(
        _dc_kernel,
        out_shape=jax.ShapeDtypeStruct((Nrows, Wcols), jnp.float32),
        grid=grid,
        in_specs=[spec, spec, spec],
        out_specs=spec,
        input_output_aliases={0: 0},              # donate the FFT buffer
        compiler_params=pltpu.CompilerParams(
            dimension_semantics=("parallel", "parallel")),
        cost_estimate=pl.CostEstimate(
            flops=3 * total,
            transcendentals=0,
            bytes_accessed=4 * total * 4),
    )(f_i, k_i, m_i)

    # ---- Back to complex and inverse FFT (XLA) ------------------------------
    out = out_i[:N, :Wp] if (pad_rows or pad_hw) else out_i
    out_ri = out.reshape(N, HW, 2)
    k_new = jax.lax.complex(out_ri[..., 0], out_ri[..., 1]).reshape(B, C, H, W)
    rec = jnp.fft.ifft2(k_new, axes=(-2, -1))
    return jnp.stack([jnp.real(rec), jnp.imag(rec)], axis=-1).astype(x.dtype)


# ----------------------------------------------------------------------------

if __name__ == "__main__":
    key = jax.random.PRNGKey(0)
    kx, kk, km = jax.random.split(key, 3)

    B, C, H, W = 2, 1, 16, 16
    x = jax.random.normal(kx, (B, C, H, W, 2), jnp.float32)
    x_k = jax.random.normal(kk, (B, C, H, W, 2), jnp.float32)
    mask = (jax.random.uniform(km, (B, C, H, W, 1)) > 0.5).astype(jnp.float32)

    fwd = jax.jit(data_consistency)
    out = jax.block_until_ready(fwd(x, x_k, mask))
    assert out.shape == (B, C, H, W, 2)
    assert bool(jnp.all(jnp.isfinite(out)))

    # Pure-JAX reference of the same math (no Pallas) for a correctness check.
    c = x[..., 0] + 1j * x[..., 1]
    ref = jnp.fft.ifft2(
        (x_k[..., 0] + 1j * x_k[..., 1])
        + jnp.fft.fft2(c, axes=(-2, -1)) * (1.0 - mask[..., 0]),
        axes=(-2, -1))
    ref = jnp.stack([jnp.real(ref), jnp.imag(ref)], axis=-1)
    assert bool(jnp.allclose(out, ref, atol=1e-4, rtol=1e-4))

    print("KERNEL_OK")
</pallas_src>

<mosaic_0001>
module attributes {stable_mosaic.version = 11 : i64} {
  func.func @_dc_kernel(%arg0: i32, %arg1: i32, %arg2: memref<2x256xf32, #tpu.memory_space<vmem>>, %arg3: memref<2x256xf32, #tpu.memory_space<vmem>>, %arg4: memref<2x256xf32, #tpu.memory_space<vmem>>, %arg5: memref<2x256xf32, #tpu.memory_space<vmem>>) attributes {dimension_semantics = [#tpu.dimension_semantics<parallel>, #tpu.dimension_semantics<parallel>], iteration_bounds = array<i64: 1, 2>, scalar_prefetch = 0 : i64, scratch_operands = 0 : i64, tpu.core_type = #tpu.core_type<tc>, window_params = [{transform_indices = @transform_0, window_bounds = array<i64: 2, 256>}, {transform_indices = @transform_1, window_bounds = array<i64: 2, 256>}, {transform_indices = @transform_2, window_bounds = array<i64: 2, 256>}, {transform_indices = @transform_3, window_bounds = array<i64: 2, 256>}]} {
    %c0 = arith.constant 0 : index
    %c0_0 = arith.constant 0 : index
    %0 = vector.load %arg3[%c0, %c0_0] : memref<2x256xf32, #tpu.memory_space<vmem>>, vector<2x256xf32>
    %c0_1 = arith.constant 0 : index
    %c0_2 = arith.constant 0 : index
    %1 = vector.load %arg2[%c0_1, %c0_2] : memref<2x256xf32, #tpu.memory_space<vmem>>, vector<2x256xf32>
    %c0_3 = arith.constant 0 : index
    %c0_4 = arith.constant 0 : index
    %2 = vector.load %arg4[%c0_3, %c0_4] : memref<2x256xf32, #tpu.memory_space<vmem>>, vector<2x256xf32>
    %cst = arith.constant 1.000000e+00 : f32
    %3 = vector.broadcast %cst : f32 to vector<2x256xf32>
    %4 = arith.subf %3, %2 : vector<2x256xf32>
    %5 = arith.mulf %1, %4 : vector<2x256xf32>
    %6 = arith.addf %0, %5 : vector<2x256xf32>
    %c0_5 = arith.constant 0 : index
    %c0_6 = arith.constant 0 : index
    %7 = vector.load %arg5[%c0_5, %c0_6] : memref<2x256xf32, #tpu.memory_space<vmem>>, vector<2x256xf32>
    tpu.vector_store %arg5[%c0_5, %c0_6], %6 {strides = array<i32>} : memref<2x256xf32, #tpu.memory_space<vmem>>, vector<2x256xf32>,
    return
  }
  func.func @transform_0(%arg0: i32, %arg1: i32) -> (i32, i32) {
    %c0_i32 = arith.constant 0 : i32
    return %arg0, %arg1 : i32, i32
  }
  func.func @transform_1(%arg0: i32, %arg1: i32) -> (i32, i32) {
    %c0_i32 = arith.constant 0 : i32
    return %arg0, %arg1 : i32, i32
  }
  func.func @transform_2(%arg0: i32, %arg1: i32) -> (i32, i32) {
    %c0_i32 = arith.constant 0 : i32
    return %arg0, %arg1 : i32, i32
  }
  func.func @transform_3(%arg0: i32, %arg1: i32) -> (i32, i32) {
    %c0_i32 = arith.constant 0 : i32
    return %arg0, %arg1 : i32, i32
  }
}

</mosaic_0001>

<llo_original>
// kernel: data_consistency.1
$region0: #{data_consistency.1}
  #allocation0 [shape = 'u32[]', space=smem, size = 0x4, offset = 0x4, fixed_abs, tag = 'smem constant byte address 0x4 - core index']
  #allocation1 [shape = 'u32[144,128]{1,0:T(1,128)}', space=vmem, size = 0x12000, scoped, tag = 'internal scratch']
  %s0 = inlined_call_operand.vmem [shape: f32[2,512], index: 0, kind: input, shape index: {}, may-alias: {0,3}]
  %s1 = inlined_call_operand.vmem [shape: f32[2,512], index: 1, kind: input, shape index: {}]
  %s2 = inlined_call_operand.vmem [shape: f32[2,512], index: 2, kind: input, shape index: {}]
  %s3 = inlined_call_operand.vmem [shape: f32[2,512], index: 3, kind: output, shape index: {}, may-alias: {0,3}]
  %s4 = sld [smem:[#allocation0]]
  $region45: #{data_consistency.1} parent=0
    _
  %s6 = ssub.s32 1, %s4
  %s7 = scalar_select 0, %s6, %s4
  loop: start=0, step=1, limit=4
  $region2: #{data_consistency.1} parent=0 // loop_pre_header
    _
  $region3: #{data_consistency.1} parent=0 // loop_header
    %s9 = sphi 0, %s13
    %p10 = scmp.ge.s32.totalorder %s9, 4
    %s16 = sphi 0, %s28
    %s17 = sphi 0, %s24
    %s18 = sphi 0, %s16
    %s19 = sphi 0, %s17
    %s20 = sphi 0, %s18
    %s21 = sphi 0, %s19
    %s33 = sphi 0, %s35
    %s36 = sphi 0, %s33
    %s37 = sphi 0, %s36
    %s53 = sphi 0, %s37
    %s61 = sphi 0, %s63
    %s64 = sphi 0, %s61
    %s65 = sphi 0, %s64
    %s81 = sphi 0, %s65
    %s89 = sphi 0, %s91
    %s92 = sphi 0, %s89
    %s93 = sphi 0, %s92
    %s109 = sphi 0, %s93
    %s117 = sphi 0, %s119
    %s120 = sphi 0, %s117
    %s121 = sphi 0, %s120
    %s137 = sphi 0, %s121
  $region4: #{data_consistency.1} parent=0 // loop_header_branch
    %12 = sbr.rel (%p10) target = $region8
  $region5: #{data_consistency.1} parent=0 // loop_body
    %s14 = ssub.s32 %s9, 1
    %s15 = ssub.s32 %s9, 2
    %s22 = sadd.s32 1, %s17
    %p23 = scmp.ge.s32.totalorder %s22, 2
    %s24 = scalar_select %p23, 0, %s22
    %s25 = sadd.s32 1, %s16
    %s26 = scalar_select %p23, %s25, %s16
    %p27 = scmp.ge.s32.totalorder %s26, 1
    %s28 = scalar_select %p27, 0, %s26
    %s29 = ssub.s32 %s16, %s28
    %s30 = ssub.s32 %s17, %s24
    %s31 = sor.u32 %s29, %s30
    %p32 = scmp.eq.s32.totalorder %s31, 0
    %s34 = sadd.s32 %s33, 1
    %s35 = scalar_select %p32, %s33, %s34
    %p38 = pneg %p32
    %p39 = scmp.eq.s32.totalorder %s9, 1
    %p40 = por %p38, %p39
    %p41 = scmp.ne.s32.totalorder %s33, %s36
    %p42 = scmp.eq.s32.totalorder %s9, 0
    %p43 = por %p41, %p42
    %p44 = scmp.ne.s32.totalorder %s33, %s36
    %p45 = scmp.eq.s32.totalorder %s14, 1
    %p46 = por %p44, %p45
    %p47 = scmp.ne.s32.totalorder %s36, %s37
    %p48 = scmp.eq.s32.totalorder %s14, 0
    %p49 = por %p47, %p48
    %p50 = scmp.ne.s32.totalorder %s36, %s37
    %p51 = scmp.eq.s32.totalorder %s15, 1
    %p52 = por %p50, %p51
    %p54 = scmp.ne.s32.totalorder %s37, %s53
    %p55 = scmp.eq.s32.totalorder %s15, 0
    %p56 = por %p54, %p55
    %s57 = ssub.s32 %s16, %s28
    %s58 = ssub.s32 %s17, %s24
    %s59 = sor.u32 %s57, %s58
    %p60 = scmp.eq.s32.totalorder %s59, 0
    %s62 = sadd.s32 %s61, 1
    %s63 = scalar_select %p60, %s61, %s62
    %p66 = pneg %p60
    %p67 = scmp.eq.s32.totalorder %s9, 1
    %p68 = por %p66, %p67
    %p69 = scmp.ne.s32.totalorder %s61, %s64
    %p70 = scmp.eq.s32.totalorder %s9, 0
    %p71 = por %p69, %p70
    %p72 = scmp.ne.s32.totalorder %s61, %s64
    %p73 = scmp.eq.s32.totalorder %s14, 1
    %p74 = por %p72, %p73
    %p75 = scmp.ne.s32.totalorder %s64, %s65
    %p76 = scmp.eq.s32.totalorder %s14, 0
    %p77 = por %p75, %p76
    %p78 = scmp.ne.s32.totalorder %s64, %s65
    %p79 = scmp.eq.s32.totalorder %s15, 1
    %p80 = por %p78, %p79
    %p82 = scmp.ne.s32.totalorder %s65, %s81
    %p83 = scmp.eq.s32.totalorder %s15, 0
    %p84 = por %p82, %p83
    %s85 = ssub.s32 %s16, %s28
    %s86 = ssub.s32 %s17, %s24
    %s87 = sor.u32 %s85, %s86
    %p88 = scmp.eq.s32.totalorder %s87, 0
    %s90 = sadd.s32 %s89, 1
    %s91 = scalar_select %p88, %s89, %s90
    %p94 = pneg %p88
    %p95 = scmp.eq.s32.totalorder %s9, 1
    %p96 = por %p94, %p95
    %p97 = scmp.ne.s32.totalorder %s89, %s92
    %p98 = scmp.eq.s32.totalorder %s9, 0
    %p99 = por %p97, %p98
    %p100 = scmp.ne.s32.totalorder %s89, %s92
    %p101 = scmp.eq.s32.totalorder %s14, 1
    %p102 = por %p100, %p101
    %p103 = scmp.ne.s32.totalorder %s92, %s93
    %p104 = scmp.eq.s32.totalorder %s14, 0
    %p105 = por %p103, %p104
    %p106 = scmp.ne.s32.totalorder %s92, %s93
    %p107 = scmp.eq.s32.totalorder %s15, 1
    %p108 = por %p106, %p107
    %p110 = scmp.ne.s32.totalorder %s93, %s109
    %p111 = scmp.eq.s32.totalorder %s15, 0
    %p112 = por %p110, %p111
    %s113 = ssub.s32 %s16, %s28
    %s114 = ssub.s32 %s17, %s24
    %s115 = sor.u32 %s113, %s114
    %p116 = scmp.eq.s32.totalorder %s115, 0
    %s118 = sadd.s32 %s117, 1
    %s119 = scalar_select %p116, %s117, %s118
    %p122 = pneg %p116
    %p123 = scmp.eq.s32.totalorder %s9, 1
    %p124 = por %p122, %p123
    %p125 = scmp.ne.s32.totalorder %s117, %s120
    %p126 = scmp.eq.s32.totalorder %s9, 0
    %p127 = por %p125, %p126
    %p128 = scmp.ne.s32.totalorder %s117, %s120
    %p129 = scmp.eq.s32.totalorder %s14, 1
    %p130 = por %p128, %p129
    %p131 = scmp.ne.s32.totalorder %s120, %s121
    %p132 = scmp.eq.s32.totalorder %s14, 0
    %p133 = por %p131, %p132
    %p134 = scmp.ne.s32.totalorder %s120, %s121
    %p135 = scmp.eq.s32.totalorder %s15, 1
    %p136 = por %p134, %p135
    %p138 = scmp.ne.s32.totalorder %s121, %s137
    %p139 = scmp.eq.s32.totalorder %s15, 0
    %p140 = por %p138, %p139
    %p141 = scmp.le.s32.totalorder 1, %s9
    %p142 = scmp.lt.s32.totalorder %s9, 3
    %p143 = pnand %p141, %p142
    %p144 = pneg %p143
    // Predicated region
    $region9: #{data_consistency.1} parent=5 // pred_check
      _
    $region10: #{data_consistency.1} parent=5 // pred_check_branch
      %146 = sbr.rel (%p143) target = $region12
    $region11: #{data_consistency.1} parent=5 // pred_region
      %s147 = ssub.s32 %s9, 1
    $region12: #{data_consistency.1} parent=5 // pred_fallthru
      _
    %p148 = scmp.lt.s32.totalorder %s9, 2
    // Predicated region
    $region13: #{data_consistency.1} parent=5 // pred_check
      %p149 = pneg %p148
    $region14: #{data_consistency.1} parent=5 // pred_check_branch
      %151 = sbr.rel (%p149) target = $region16
    $region15: #{data_consistency.1} parent=5 // pred_region
      // Predicated region
      $region17: #{data_consistency.1} parent=15 // pred_check
        %p152 = pneg %p43
      $region18: #{data_consistency.1} parent=15 // pred_check_branch
        %154 = sbr.rel (%p152) target = $region20
      $region19: #{data_consistency.1} parent=15 // pred_region
        %s155 = smul.u32 2, %s17
        %p156 = scmp.lt.s32.totalorder %s16, 0
        %s157 = scalar_select %p156, %s16, 0
        %p158 = scmp.lt.s32.totalorder %s155, 3
        %s159 = scalar_select %p158, %s155, 3
        %s160 = smul.addr %s157, 4
        %s161 = sadd.s32 %s159, %s160
        %s162 = smul.addr %s161, 2
        %s163 = scalar_lea.vmem %s0, %s162
        %s164 = smul.u32 2, %s17
      $region20: #{data_consistency.1} parent=15 // pred_fallthru
        _
      // Predicated region
      $region21: #{data_consistency.1} parent=15 // pred_check
        %p165 = pneg %p71
      $region22: #{data_consistency.1} parent=15 // pred_check_branch
        %167 = sbr.rel (%p165) target = $region24
      $region23: #{data_consistency.1} parent=15 // pred_region
        %s168 = smul.u32 2, %s17
        %p169 = scmp.lt.s32.totalorder %s16, 0
        %s170 = scalar_select %p169, %s16, 0
        %p171 = scmp.lt.s32.totalorder %s168, 3
        %s172 = scalar_select %p171, %s168, 3
        %s173 = smul.addr %s170, 4
        %s174 = sadd.s32 %s172, %s173
        %s175 = smul.addr %s174, 2
        %s176 = scalar_lea.vmem %s1, %s175
        %s177 = smul.u32 2, %s17
      $region24: #{data_consistency.1} parent=15 // pred_fallthru
        _
      // Predicated region
      $region25: #{data_consistency.1} parent=15 // pred_check
        %p178 = pneg %p99
      $region26: #{data_consistency.1} parent=15 // pred_check_branch
        %180 = sbr.rel (%p178) target = $region28
      $region27: #{data_consistency.1} parent=15 // pred_region
        %s181 = smul.u32 2, %s17
        %p182 = scmp.lt.s32.totalorder %s16, 0
        %s183 = scalar_select %p182, %s16, 0
        %p184 = scmp.lt.s32.totalorder %s181, 3
        %s185 = scalar_select %p184, %s181, 3
        %s186 = smul.addr %s183, 4
        %s187 = sadd.s32 %s185, %s186
        %s188 = smul.addr %s187, 2
        %s189 = scalar_lea.vmem %s2, %s188
        %s190 = smul.u32 2, %s17
      $region28: #{data_consistency.1} parent=15 // pred_fallthru
        _
    $region16: #{data_consistency.1} parent=5 // pred_fallthru
      _
    %p191 = scmp.le.s32.totalorder 1, %s9
    %p192 = scmp.lt.s32.totalorder %s9, 3
    %p193 = pnand %p191, %p192
    %p194 = pneg %p193
    // Predicated region
    $region29: #{data_consistency.1} parent=5 // pred_check
      _
    $region30: #{data_consistency.1} parent=5 // pred_check_branch
      %196 = sbr.rel (%p193) target = $region32
    $region31: #{data_consistency.1} parent=5 // pred_region
      %s197 = ssub.s32 %s9, 1
      %s198 = smul.u32 2, %s19
      %p199 = scmp.lt.s32.totalorder %s18, 0
      %s200 = scalar_select %p199, %s18, 0
      %p201 = scmp.lt.s32.totalorder %s198, 3
      %s202 = scalar_select %p201, %s198, 3
      %s203 = smul.addr %s200, 4
      %s204 = sadd.s32 %s202, %s203
      %s205 = smul.addr %s204, 2
      %s206 = scalar_lea.vmem %s0, %s205
      %p207 = pneg %p49
      %p208 = pneg %p46
      %s209 = smul.u32 2, %s19
      %p210 = scmp.lt.s32.totalorder %s18, 0
      %s211 = scalar_select %p210, %s18, 0
      %p212 = scmp.lt.s32.totalorder %s209, 3
      %s213 = scalar_select %p212, %s209, 3
      %s214 = smul.addr %s211, 4
      %s215 = sadd.s32 %s213, %s214
      %s216 = smul.addr %s215, 2
      %s217 = scalar_lea.vmem %s1, %s216
      %p218 = pneg %p77
      %p219 = pneg %p74
      %s220 = smul.u32 2, %s19
      %p221 = scmp.lt.s32.totalorder %s18, 0
      %s222 = scalar_select %p221, %s18, 0
      %p223 = scmp.lt.s32.totalorder %s220, 3
      %s224 = scalar_select %p223, %s220, 3
      %s225 = smul.addr %s222, 4
      %s226 = sadd.s32 %s224, %s225
      %s227 = smul.addr %s226, 2
      %s228 = scalar_lea.vmem %s2, %s227
      %p229 = pneg %p105
      %p230 = pneg %p102
      %p231 = pneg %p133
      %p232 = pneg %p130
      %s233 = smul.u32 2, %s19
      %p234 = scmp.lt.s32.totalorder %s18, 0
      %s235 = scalar_select %p234, %s18, 0
      %p236 = scmp.lt.s32.totalorder %s233, 3
      %s237 = scalar_select %p236, %s233, 3
      %s238 = smul.addr %s235, 4
      %s239 = sadd.s32 %s237, %s238
      %s240 = smul.addr %s239, 2
      %s241 = scalar_lea.vmem %s3, %s240
      %s242 = smul.u32 2, %s19
      %p243 = scmp.lt.s32.totalorder %s18, 0
      %s244 = scalar_select %p243, %s18, 0
      %p245 = scmp.lt.s32.totalorder %s242, 3
      %s246 = scalar_select %p245, %s242, 3
      %s247 = smul.addr %s244, 4
      %s248 = sadd.s32 %s246, %s247
      %s249 = smul.addr %s248, 2
      %s250 = scalar_lea.vmem %s0, %s249
      %s251 = smul.u32 2, %s19
      %s252 = smul.u32 2, %s19
      %p253 = scmp.lt.s32.totalorder %s18, 0
      %s254 = scalar_select %p253, %s18, 0
      %p255 = scmp.lt.s32.totalorder %s252, 3
      %s256 = scalar_select %p255, %s252, 3
      %s257 = smul.addr %s254, 4
      %s258 = sadd.s32 %s256, %s257
      %s259 = smul.addr %s258, 2
      %s260 = scalar_lea.vmem %s1, %s259
      %s261 = smul.u32 2, %s19
      %s262 = smul.u32 2, %s19
      %p263 = scmp.lt.s32.totalorder %s18, 0
      %s264 = scalar_select %p263, %s18, 0
      %p265 = scmp.lt.s32.totalorder %s262, 3
      %s266 = scalar_select %p265, %s262, 3
      %s267 = smul.addr %s264, 4
      %s268 = sadd.s32 %s266, %s267
      %s269 = smul.addr %s268, 2
      %s270 = scalar_lea.vmem %s2, %s269
      %s271 = smul.u32 2, %s19
      %s272 = smul.u32 2, %s19
      %p273 = scmp.lt.s32.totalorder %s18, 0
      %s274 = scalar_select %p273, %s18, 0
      %p275 = scmp.lt.s32.totalorder %s272, 3
      %s276 = scalar_select %p275, %s272, 3
      %s277 = smul.addr %s274, 4
      %s278 = sadd.s32 %s276, %s277
      %s279 = smul.addr %s278, 2
      %s280 = scalar_lea.vmem %s3, %s279
      %s281 = smul.u32 2, %s19
      %v282 = vld [vmem:[%s260] sm:$0xf]
      %v283 = vld [vmem:[%s250] sm:$0xf]
      %v284 = vld [vmem:[%s270] sm:$0xf]
      %v285 = vsub.f32 1.0, %v284
      %v286 = vmul.f32 %v283, %v285
      %v287 = vadd.f32 %v282, %v286
      %288 = vst [vmem:[%s280] sm:$0xf] %v287
      %s289 = smul.u32 2, %s19
      %p290 = scmp.lt.s32.totalorder %s18, 0
      %s291 = scalar_select %p290, %s18, 0
      %p292 = scmp.lt.s32.totalorder %s289, 3
      %s293 = scalar_select %p292, %s289, 3
      %s294 = smul.addr %s291, 4
      %s295 = sadd.s32 %s293, %s294
      %s296 = smul.addr %s295, 2
      %s297 = scalar_lea.vmem %s3, %s296
      // Predicated region
      $region33: #{data_consistency.1} parent=31 // pred_check
        %p298 = pneg %p130
      $region34: #{data_consistency.1} parent=31 // pred_check_branch
        %300 = sbr.rel (%p298) target = $region36
      $region35: #{data_consistency.1} parent=31 // pred_region
        %s301 = smul.u32 2, %s19
      $region36: #{data_consistency.1} parent=31 // pred_fallthru
        _
    $region32: #{data_consistency.1} parent=5 // pred_fallthru
      _
    %p302 = scmp.le.s32.totalorder 2, %s9
    // Predicated region
    $region37: #{data_consistency.1} parent=5 // pred_check
      %p303 = pneg %p302
    $region38: #{data_consistency.1} parent=5 // pred_check_branch
      %305 = sbr.rel (%p303) target = $region40
    $region39: #{data_consistency.1} parent=5 // pred_region
      %s306 = ssub.s32 %s9, 2
      // Predicated region
      $region41: #{data_consistency.1} parent=39 // pred_check
        %p307 = pneg %p136
      $region42: #{data_consistency.1} parent=39 // pred_check_branch
        %309 = sbr.rel (%p307) target = $region44
      $region43: #{data_consistency.1} parent=39 // pred_region
        %s310 = smul.u32 2, %s21
        %p311 = scmp.lt.s32.totalorder %s20, 0
        %s312 = scalar_select %p311, %s20, 0
        %p313 = scmp.lt.s32.totalorder %s310, 3
        %s314 = scalar_select %p313, %s310, 3
        %s315 = smul.addr %s312, 4
        %s316 = sadd.s32 %s314, %s315
        %s317 = smul.addr %s316, 2
        %s318 = scalar_lea.vmem %s3, %s317
      $region44: #{data_consistency.1} parent=39 // pred_fallthru
        _
    $region40: #{data_consistency.1} parent=5 // pred_fallthru
      _
  $region6: #{data_consistency.1} parent=0 // loop_footer
    %s13 = sadd.s32 1, %s9
  $region7: #{data_consistency.1} parent=0 // loop_footer_branch
    %8 = sbr.rel target = $region3
  $region8: #{data_consistency.1} parent=0 // loop_exit
    _

</llo_original>
